<compile_context>
chip_gen: v5e
topology: v5e:2x2
jax: 0.10.0
libtpu: 0.0.40
codegen_flags: <defaults>
</compile_context>

<pallas_src>
import functools

import jax
import jax.numpy as jnp
from jax.experimental import pallas as pl
from jax.experimental.pallas import tpu as pltpu

_BETA = 1.0 / 9.0
_VMEM_LIMIT = 32 * 1024 * 1024  # safe on v5e/v6e/v7x; blocks are tiny anyway


# ---------------------------------------------------------------------------
# Helpers
# ---------------------------------------------------------------------------
def _pick_lane_tile(hw, max_tile=2048):
    """Largest multiple-of-128 divisor of hw that is <= max_tile (or hw itself)."""
    if hw % 128 != 0:
        return hw  # full-dim rule: un-tiled last dim is always legal
    t = min(hw, max_tile)
    t -= t % 128
    while t >= 128:
        if hw % t == 0:
            return t
        t -= 128
    return hw


def _prep_mask(mask, pred):
    """Return mask as (B, mr, H*W) without materializing a channel broadcast."""
    B, C, H, W = pred.shape
    m = mask
    if m.ndim == 3:
        m = m[:, None, :, :]
    if m.shape[1] not in (1, C):
        m = jnp.broadcast_to(m, pred.shape)
    mr = m.shape[1]
    return m.reshape(B, mr, H * W), mr


def _grid_flags():
    first = jnp.logical_and(pl.program_id(0) == 0, pl.program_id(1) == 0)
    last = jnp.logical_and(pl.program_id(0) == pl.num_programs(0) - 1,
                           pl.program_id(1) == pl.num_programs(1) - 1)
    return first, last


# Per-tile compute helpers (all math in f32).
def _heatmap_tile_sum(pred_ref, gt_ref, mask_ref):
    p = pred_ref[...].astype(jnp.float32)
    g = gt_ref[...].astype(jnp.float32)
    m = mask_ref[...].astype(jnp.float32)  # (1, 1|C, T): broadcasts in-register
    d = p - g
    return jnp.sum(d * d * m)


def _smooth_l1_tile_sums(pred_ref, gt_ref, w_ref):
    p = pred_ref[...].astype(jnp.float32)
    g = gt_ref[...].astype(jnp.float32)
    w = w_ref[...]  # load once; reused for product AND num_pos count
    l1 = jnp.abs(p - g)
    sl1 = jnp.where(l1 < _BETA, (0.5 / _BETA) * l1 * l1, l1 - 0.5 * _BETA)
    wsum = jnp.sum(sl1 * w.astype(jnp.float32))
    npos = jnp.sum((w > 0).astype(jnp.float32))
    return wsum, npos


# ---------------------------------------------------------------------------
# Kernels
# ---------------------------------------------------------------------------
def _fused_kernel(hm_scale, off_factor,
                  pred_hm_ref, gt_hm_ref, mask_ref,
                  po_ref, og_ref, ow_ref,
                  lo_ref, lg_ref, lw_ref,
                  hm_out_ref, off_out_ref, acc_ref):
    first, last = _grid_flags()

    @pl.when(first)
    def _init():
        for i in range(5):
            acc_ref[i] = 0.0

    hm_sum = _heatmap_tile_sum(pred_hm_ref, gt_hm_ref, mask_ref)
    s1, n1 = _smooth_l1_tile_sums(po_ref, og_ref, ow_ref)
    s2, n2 = _smooth_l1_tile_sums(lo_ref, lg_ref, lw_ref)

    acc_ref[0] = acc_ref[0] + hm_sum
    acc_ref[1] = acc_ref[1] + s1
    acc_ref[2] = acc_ref[2] + n1
    acc_ref[3] = acc_ref[3] + s2
    acc_ref[4] = acc_ref[4] + n2

    @pl.when(last)
    def _finalize():
        hm_out_ref[0, 0] = acc_ref[0] * hm_scale
        d1 = jnp.where(acc_ref[2] == 0.0, 1.0, acc_ref[2])
        d2 = jnp.where(acc_ref[4] == 0.0, 1.0, acc_ref[4])
        off_out_ref[0, 0] = (acc_ref[1] / d1 + acc_ref[3] / d2) * off_factor


def _heatmap_only_kernel(hm_scale, pred_ref, gt_ref, mask_ref, out_ref, acc_ref):
    first, last = _grid_flags()

    @pl.when(first)
    def _init():
        acc_ref[0] = 0.0

    acc_ref[0] = acc_ref[0] + _heatmap_tile_sum(pred_ref, gt_ref, mask_ref)

    @pl.when(last)
    def _finalize():
        out_ref[0, 0] = acc_ref[0] * hm_scale


def _offsets_only_kernel(off_factor, po_ref, og_ref, ow_ref,
                         lo_ref, lg_ref, lw_ref, out_ref, acc_ref):
    first, last = _grid_flags()

    @pl.when(first)
    def _init():
        for i in range(4):
            acc_ref[i] = 0.0

    s1, n1 = _smooth_l1_tile_sums(po_ref, og_ref, ow_ref)
    s2, n2 = _smooth_l1_tile_sums(lo_ref, lg_ref, lw_ref)
    acc_ref[0] = acc_ref[0] + s1
    acc_ref[1] = acc_ref[1] + n1
    acc_ref[2] = acc_ref[2] + s2
    acc_ref[3] = acc_ref[3] + n2

    @pl.when(last)
    def _finalize():
        d1 = jnp.where(acc_ref[1] == 0.0, 1.0, acc_ref[1])
        d2 = jnp.where(acc_ref[3] == 0.0, 1.0, acc_ref[3])
        out_ref[0, 0] = (acc_ref[0] / d1 + acc_ref[2] / d2) * off_factor


# ---------------------------------------------------------------------------
# pallas_call wrappers
# ---------------------------------------------------------------------------
def _row_spec(rows, T):
    return pl.BlockSpec((1, rows, T), lambda b, t: (b, 0, t))


def _common_params():
    return pltpu.CompilerParams(
        dimension_semantics=("arbitrary", "arbitrary"),
        vmem_limit_bytes=_VMEM_LIMIT,
    )


def fused_multi_loss(output, heatmap, mask, poffset, offset, offset_w,
                     loffset, limbs_offset, limbs_weight,
                     heatmap_factor, offset_factor):
    """One pallas_call computing (heatmap_loss, offset_loss) as scalars."""
    B, C, H, W = output.shape
    HW = H * W
    assert heatmap.shape == output.shape
    assert poffset.shape == offset.shape == offset_w.shape
    assert loffset.shape == limbs_offset.shape == limbs_weight.shape
    assert poffset.shape[0] == B and poffset.shape[2:] == (H, W)
    assert loffset.shape[0] == B and loffset.shape[2:] == (H, W)

    m, mr = _prep_mask(mask, output)
    R1 = poffset.shape[1]
    R2 = loffset.shape[1]

    T = _pick_lane_tile(HW)
    grid = (B, HW // T)

    hm_scale = float(heatmap_factor) / float(output.size)
    kernel = functools.partial(_fused_kernel, hm_scale, float(offset_factor))

    n_elem = (output.size + heatmap.size + m.size
              + 3 * poffset.size + 3 * loffset.size)
    cost = pl.CostEstimate(flops=int(6 * n_elem), transcendentals=0,
                           bytes_accessed=int(4 * n_elem + 8))

    hm_out, off_out = pl.pallas_call(
        kernel,
        out_shape=(jax.ShapeDtypeStruct((1, 1), jnp.float32),
                   jax.ShapeDtypeStruct((1, 1), jnp.float32)),
        grid=grid,
        in_specs=[_row_spec(C, T), _row_spec(C, T), _row_spec(mr, T),
                  _row_spec(R1, T), _row_spec(R1, T), _row_spec(R1, T),
                  _row_spec(R2, T), _row_spec(R2, T), _row_spec(R2, T)],
        out_specs=(pl.BlockSpec(memory_space=pltpu.MemorySpace.SMEM),
                   pl.BlockSpec(memory_space=pltpu.MemorySpace.SMEM)),
        scratch_shapes=[pltpu.SMEM((8,), jnp.float32)],
        compiler_params=_common_params(),
        cost_estimate=cost,
    )(output.reshape(B, C, HW), heatmap.reshape(B, C, HW), m,
      poffset.reshape(B, R1, HW), offset.reshape(B, R1, HW),
      offset_w.reshape(B, R1, HW),
      loffset.reshape(B, R2, HW), limbs_offset.reshape(B, R2, HW),
      limbs_weight.reshape(B, R2, HW))
    return hm_out[0, 0], off_out[0, 0]


def heatmap_only_loss(pred, gt, mask, factor):
    B, C, H, W = pred.shape
    HW = H * W
    m, mr = _prep_mask(mask, pred)
    T = _pick_lane_tile(HW)
    grid = (B, HW // T)
    kernel = functools.partial(_heatmap_only_kernel, float(factor) / float(pred.size))
    out = pl.pallas_call(
        kernel,
        out_shape=jax.ShapeDtypeStruct((1, 1), jnp.float32),
        grid=grid,
        in_specs=[_row_spec(C, T), _row_spec(C, T), _row_spec(mr, T)],
        out_specs=pl.BlockSpec(memory_space=pltpu.MemorySpace.SMEM),
        scratch_shapes=[pltpu.SMEM((8,), jnp.float32)],
        compiler_params=_common_params(),
    )(pred.reshape(B, C, HW), gt.reshape(B, C, HW), m)
    return out[0, 0]


def offsets_only_loss(poffset, offset, offset_w, loffset, limbs_offset,
                      limbs_weight, factor):
    B, R1, H, W = poffset.shape
    R2 = loffset.shape[1]
    HW = H * W
    T = _pick_lane_tile(HW)
    grid = (B, HW // T)
    kernel = functools.partial(_offsets_only_kernel, float(factor))
    out = pl.pallas_call(
        kernel,
        out_shape=jax.ShapeDtypeStruct((1, 1), jnp.float32),
        grid=grid,
        in_specs=[_row_spec(R1, T), _row_spec(R1, T), _row_spec(R1, T),
                  _row_spec(R2, T), _row_spec(R2, T), _row_spec(R2, T)],
        out_specs=pl.BlockSpec(memory_space=pltpu.MemorySpace.SMEM),
        scratch_shapes=[pltpu.SMEM((8,), jnp.float32)],
        compiler_params=_common_params(),
    )(poffset.reshape(B, R1, HW), offset.reshape(B, R1, HW),
      offset_w.reshape(B, R1, HW),
      loffset.reshape(B, R2, HW), limbs_offset.reshape(B, R2, HW),
      limbs_weight.reshape(B, R2, HW))
    return out[0, 0]


# ---------------------------------------------------------------------------
# MultiLossFactory equivalent
# ---------------------------------------------------------------------------
class MultiLossFactory:
    def __init__(self, cfg):
        self.num_joints = cfg["MODEL"]["NUM_JOINTS"]
        self.bg_weight = cfg["DATASET"]["BG_WEIGHT"]
        self.with_heatmaps_loss = cfg["LOSS"]["WITH_HEATMAPS_LOSS"]
        self.heatmap_loss_factor = cfg["LOSS"]["HEATMAPS_LOSS_FACTOR"]
        self.with_offsets_loss = cfg["LOSS"]["WITH_OFFSETS_LOSS"]
        self.offset_loss_factor = cfg["LOSS"]["OFFSETS_LOSS_FACTOR"]

    def __call__(self, output, poffset, loffset, heatmap, mask, offset,
                 offset_w, limbs_offset, limbs_weight):
        if self.with_heatmaps_loss and self.with_offsets_loss:
            return fused_multi_loss(output, heatmap, mask,
                                    poffset, offset, offset_w,
                                    loffset, limbs_offset, limbs_weight,
                                    self.heatmap_loss_factor,
                                    self.offset_loss_factor)
        hm_loss = None
        off_loss = None
        if self.with_heatmaps_loss:
            hm_loss = heatmap_only_loss(output, heatmap, mask,
                                        self.heatmap_loss_factor)
        if self.with_offsets_loss:
            off_loss = offsets_only_loss(poffset, offset, offset_w,
                                         loffset, limbs_offset, limbs_weight,
                                         self.offset_loss_factor)
        return hm_loss, off_loss


# ---------------------------------------------------------------------------
# Pure-JAX reference (for sanity checking semantics)
# ---------------------------------------------------------------------------
def _ref_heatmap(pred, gt, mask):
    return jnp.mean((pred - gt) ** 2 * jnp.broadcast_to(mask, pred.shape))


def _ref_offset(pred, gt, w, beta=1.0 / 9.0):
    l1 = jnp.abs(pred - gt)
    sl1 = jnp.where(l1 < beta, 0.5 * l1 * l1 / beta, l1 - 0.5 * beta)
    num_pos = jnp.sum((w > 0).astype(jnp.float32))
    denom = jnp.where(num_pos == 0, 1.0, num_pos)
    return jnp.sum(sl1 * w) / denom


if __name__ == "__main__":
    cfg = {
        "MODEL": {"NUM_JOINTS": 4},
        "DATASET": {"BG_WEIGHT": 0.1},
        "LOSS": {
            "WITH_HEATMAPS_LOSS": True,
            "HEATMAPS_LOSS_FACTOR": 1.0,
            "WITH_OFFSETS_LOSS": True,
            "OFFSETS_LOSS_FACTOR": 0.03,
        },
    }

    B, J, H, W = 2, cfg["MODEL"]["NUM_JOINTS"], 16, 16
    NUM_OFF = 2 * J
    NUM_LIMB_OFF = 2 * J

    key = jax.random.PRNGKey(0)
    ks = jax.random.split(key, 9)

    output = jax.random.normal(ks[0], (B, J, H, W), jnp.float32)
    heatmap = jax.random.uniform(ks[1], (B, J, H, W), jnp.float32)
    mask = (jax.random.uniform(ks[2], (B, 1, H, W)) > 0.2).astype(jnp.float32)

    poffset = jax.random.normal(ks[3], (B, NUM_OFF, H, W), jnp.float32)
    offset = jax.random.normal(ks[4], (B, NUM_OFF, H, W), jnp.float32)
    offset_w = (jax.random.uniform(ks[5], (B, NUM_OFF, H, W)) > 0.7).astype(jnp.float32)

    loffset = jax.random.normal(ks[6], (B, NUM_LIMB_OFF, H, W), jnp.float32)
    limbs_offset = jax.random.normal(ks[7], (B, NUM_LIMB_OFF, H, W), jnp.float32)
    limbs_weight = (jax.random.uniform(ks[8], (B, NUM_LIMB_OFF, H, W)) > 0.7).astype(jnp.float32)

    loss_factory = MultiLossFactory(cfg)
    hm_loss, off_loss = loss_factory(output, poffset, loffset, heatmap, mask,
                                     offset, offset_w, limbs_offset, limbs_weight)
    hm_loss = jax.block_until_ready(hm_loss)
    off_loss = jax.block_until_ready(off_loss)

    hm_ref = _ref_heatmap(output, heatmap, mask) * cfg["LOSS"]["HEATMAPS_LOSS_FACTOR"]
    off_ref = (_ref_offset(poffset, offset, offset_w)
               + _ref_offset(loffset, limbs_offset, limbs_weight)) * cfg["LOSS"]["OFFSETS_LOSS_FACTOR"]

    assert jnp.allclose(hm_loss, hm_ref, rtol=1e-5, atol=1e-6), (hm_loss, hm_ref)
    assert jnp.allclose(off_loss, off_ref, rtol=1e-5, atol=1e-6), (off_loss, off_ref)

    print("KERNEL_OK")
</pallas_src>

<mosaic_0001>
module attributes {stable_mosaic.version = 11 : i64} {
  func.func @_fused_kernel(%arg0: i32, %arg1: i32, %arg2: memref<1x4x256xf32, #tpu.memory_space<vmem>>, %arg3: memref<1x4x256xf32, #tpu.memory_space<vmem>>, %arg4: memref<1x1x256xf32, #tpu.memory_space<vmem>>, %arg5: memref<1x8x256xf32, #tpu.memory_space<vmem>>, %arg6: memref<1x8x256xf32, #tpu.memory_space<vmem>>, %arg7: memref<1x8x256xf32, #tpu.memory_space<vmem>>, %arg8: memref<1x8x256xf32, #tpu.memory_space<vmem>>, %arg9: memref<1x8x256xf32, #tpu.memory_space<vmem>>, %arg10: memref<1x8x256xf32, #tpu.memory_space<vmem>>, %arg11: memref<1x1xf32, #tpu.memory_space<smem>>, %arg12: memref<1x1xf32, #tpu.memory_space<smem>>, %arg13: memref<8xf32, #tpu.memory_space<smem>>) attributes {dimension_semantics = [#tpu.dimension_semantics<arbitrary>, #tpu.dimension_semantics<arbitrary>], iteration_bounds = array<i64: 2, 1>, scalar_prefetch = 0 : i64, scratch_operands = 1 : i64, tpu.core_type = #tpu.core_type<tc>, window_params = [{transform_indices = @transform_0, window_bounds = array<i64: 1, 4, 256>}, {transform_indices = @transform_1, window_bounds = array<i64: 1, 4, 256>}, {transform_indices = @transform_2, window_bounds = array<i64: 1, 1, 256>}, {transform_indices = @transform_3, window_bounds = array<i64: 1, 8, 256>}, {transform_indices = @transform_4, window_bounds = array<i64: 1, 8, 256>}, {transform_indices = @transform_5, window_bounds = array<i64: 1, 8, 256>}, {transform_indices = @transform_6, window_bounds = array<i64: 1, 8, 256>}, {transform_indices = @transform_7, window_bounds = array<i64: 1, 8, 256>}, {transform_indices = @transform_8, window_bounds = array<i64: 1, 8, 256>}, {transform_indices = @transform_9, window_bounds = array<i64: 1, 1>}, {transform_indices = @transform_10, window_bounds = array<i64: 1, 1>}]} {
    %c0_i32 = arith.constant 0 : i32
    %0 = arith.cmpi eq, %arg0, %c0_i32 : i32
    %c0_i32_0 = arith.constant 0 : i32
    %1 = arith.cmpi eq, %arg1, %c0_i32_0 : i32
    %2 = arith.andi %0, %1 : i1
    %c1_i32 = arith.constant 1 : i32
    %3 = arith.cmpi eq, %arg0, %c1_i32 : i32
    %c0_i32_1 = arith.constant 0 : i32
    %4 = arith.cmpi eq, %arg1, %c0_i32_1 : i32
    %5 = arith.andi %3, %4 : i1
    %6 = arith.extui %2 : i1 to i32
    %c0_i32_2 = arith.constant 0 : i32
    %7 = arith.cmpi ne, %6, %c0_i32_2 : i32
    scf.if %7 {
      %cst_48 = arith.constant 0.000000e+00 : f32
      %c0_49 = arith.constant 0 : index
      %88 = memref.load %arg13[%c0_49] : memref<8xf32, #tpu.memory_space<smem>>
      memref.store %cst_48, %arg13[%c0_49] : memref<8xf32, #tpu.memory_space<smem>>
      %cst_50 = arith.constant 0.000000e+00 : f32
      %c1_51 = arith.constant 1 : index
      %89 = memref.load %arg13[%c1_51] : memref<8xf32, #tpu.memory_space<smem>>
      memref.store %cst_50, %arg13[%c1_51] : memref<8xf32, #tpu.memory_space<smem>>
      %cst_52 = arith.constant 0.000000e+00 : f32
      %c2_53 = arith.constant 2 : index
      %90 = memref.load %arg13[%c2_53] : memref<8xf32, #tpu.memory_space<smem>>
      memref.store %cst_52, %arg13[%c2_53] : memref<8xf32, #tpu.memory_space<smem>>
      %cst_54 = arith.constant 0.000000e+00 : f32
      %c3_55 = arith.constant 3 : index
      %91 = memref.load %arg13[%c3_55] : memref<8xf32, #tpu.memory_space<smem>>
      memref.store %cst_54, %arg13[%c3_55] : memref<8xf32, #tpu.memory_space<smem>>
      %cst_56 = arith.constant 0.000000e+00 : f32
      %c4_57 = arith.constant 4 : index
      %92 = memref.load %arg13[%c4_57] : memref<8xf32, #tpu.memory_space<smem>>
      memref.store %cst_56, %arg13[%c4_57] : memref<8xf32, #tpu.memory_space<smem>>
    } else {
    }
    %c0 = arith.constant 0 : index
    %c0_3 = arith.constant 0 : index
    %c0_4 = arith.constant 0 : index
    %8 = vector.load %arg2[%c0, %c0_3, %c0_4] : memref<1x4x256xf32, #tpu.memory_space<vmem>>, vector<1x4x256xf32>
    %c0_5 = arith.constant 0 : index
    %c0_6 = arith.constant 0 : index
    %c0_7 = arith.constant 0 : index
    %9 = vector.load %arg3[%c0_5, %c0_6, %c0_7] : memref<1x4x256xf32, #tpu.memory_space<vmem>>, vector<1x4x256xf32>
    %c0_8 = arith.constant 0 : index
    %c0_9 = arith.constant 0 : index
    %c0_10 = arith.constant 0 : index
    %10 = vector.load %arg4[%c0_8, %c0_9, %c0_10] : memref<1x1x256xf32, #tpu.memory_space<vmem>>, vector<1x1x256xf32>
    %11 = arith.subf %8, %9 : vector<1x4x256xf32>
    %12 = arith.mulf %11, %11 : vector<1x4x256xf32>
    %13 = vector.broadcast %10 : vector<1x1x256xf32> to vector<1x4x256xf32>
    %14 = arith.mulf %12, %13 : vector<1x4x256xf32>
    %15 = vector.shape_cast %14 : vector<1x4x256xf32> to vector<1x1x4x256xf32>
    %cst = arith.constant dense<0.000000e+00> : vector<1xf32>
    %16 = vector.multi_reduction <add>, %15, %cst [1, 2, 3] : vector<1x1x4x256xf32> to vector<1xf32>
    %17 = vector.shape_cast %16 : vector<1xf32> to vector<1x1x1x1xf32>
    %18 = vector.extract %17[0, 0, 0, 0] : f32 from vector<1x1x1x1xf32>
    %c0_11 = arith.constant 0 : index
    %c0_12 = arith.constant 0 : index
    %c0_13 = arith.constant 0 : index
    %19 = vector.load %arg5[%c0_11, %c0_12, %c0_13] : memref<1x8x256xf32, #tpu.memory_space<vmem>>, vector<1x8x256xf32>
    %c0_14 = arith.constant 0 : index
    %c0_15 = arith.constant 0 : index
    %c0_16 = arith.constant 0 : index
    %20 = vector.load %arg6[%c0_14, %c0_15, %c0_16] : memref<1x8x256xf32, #tpu.memory_space<vmem>>, vector<1x8x256xf32>
    %c0_17 = arith.constant 0 : index
    %c0_18 = arith.constant 0 : index
    %c0_19 = arith.constant 0 : index
    %21 = vector.load %arg7[%c0_17, %c0_18, %c0_19] : memref<1x8x256xf32, #tpu.memory_space<vmem>>, vector<1x8x256xf32>
    %22 = arith.subf %19, %20 : vector<1x8x256xf32>
    %23 = math.absf %22 : vector<1x8x256xf32>
    %cst_20 = arith.constant 0.111111112 : f32
    %24 = vector.broadcast %cst_20 : f32 to vector<1x8x256xf32>
    %25 = arith.cmpf olt, %23, %24 : vector<1x8x256xf32>
    %cst_21 = arith.constant 4.500000e+00 : f32
    %26 = vector.broadcast %cst_21 : f32 to vector<1x8x256xf32>
    %27 = arith.mulf %26, %23 : vector<1x8x256xf32>
    %28 = arith.mulf %27, %23 : vector<1x8x256xf32>
    %cst_22 = arith.constant 0.055555556 : f32
    %29 = vector.broadcast %cst_22 : f32 to vector<1x8x256xf32>
    %30 = arith.subf %23, %29 : vector<1x8x256xf32>
    %31 = arith.select %25, %28, %30 : vector<1x8x256xi1>, vector<1x8x256xf32>
    %32 = arith.mulf %31, %21 : vector<1x8x256xf32>
    %33 = vector.shape_cast %32 : vector<1x8x256xf32> to vector<1x1x8x256xf32>
    %cst_23 = arith.constant dense<0.000000e+00> : vector<1xf32>
    %34 = vector.multi_reduction <add>, %33, %cst_23 [1, 2, 3] : vector<1x1x8x256xf32> to vector<1xf32>
    %35 = vector.shape_cast %34 : vector<1xf32> to vector<1x1x1x1xf32>
    %36 = vector.extract %35[0, 0, 0, 0] : f32 from vector<1x1x1x1xf32>
    %cst_24 = arith.constant 0.000000e+00 : f32
    %37 = vector.broadcast %cst_24 : f32 to vector<1x8x256xf32>
    %38 = arith.cmpf ogt, %21, %37 : vector<1x8x256xf32>
    %39 = arith.extui %38 : vector<1x8x256xi1> to vector<1x8x256xi32>
    %40 = arith.sitofp %39 : vector<1x8x256xi32> to vector<1x8x256xf32>
    %41 = vector.shape_cast %40 : vector<1x8x256xf32> to vector<1x1x8x256xf32>
    %cst_25 = arith.constant dense<0.000000e+00> : vector<1xf32>
    %42 = vector.multi_reduction <add>, %41, %cst_25 [1, 2, 3] : vector<1x1x8x256xf32> to vector<1xf32>
    %43 = vector.shape_cast %42 : vector<1xf32> to vector<1x1x1x1xf32>
    %44 = vector.extract %43[0, 0, 0, 0] : f32 from vector<1x1x1x1xf32>
    %c0_26 = arith.constant 0 : index
    %c0_27 = arith.constant 0 : index
    %c0_28 = arith.constant 0 : index
    %45 = vector.load %arg8[%c0_26, %c0_27, %c0_28] : memref<1x8x256xf32, #tpu.memory_space<vmem>>, vector<1x8x256xf32>
    %c0_29 = arith.constant 0 : index
    %c0_30 = arith.constant 0 : index
    %c0_31 = arith.constant 0 : index
    %46 = vector.load %arg9[%c0_29, %c0_30, %c0_31] : memref<1x8x256xf32, #tpu.memory_space<vmem>>, vector<1x8x256xf32>
    %c0_32 = arith.constant 0 : index
    %c0_33 = arith.constant 0 : index
    %c0_34 = arith.constant 0 : index
    %47 = vector.load %arg10[%c0_32, %c0_33, %c0_34] : memref<1x8x256xf32, #tpu.memory_space<vmem>>, vector<1x8x256xf32>
    %48 = arith.subf %45, %46 : vector<1x8x256xf32>
    %49 = math.absf %48 : vector<1x8x256xf32>
    %cst_35 = arith.constant 0.111111112 : f32
    %50 = vector.broadcast %cst_35 : f32 to vector<1x8x256xf32>
    %51 = arith.cmpf olt, %49, %50 : vector<1x8x256xf32>
    %cst_36 = arith.constant 4.500000e+00 : f32
    %52 = vector.broadcast %cst_36 : f32 to vector<1x8x256xf32>
    %53 = arith.mulf %52, %49 : vector<1x8x256xf32>
    %54 = arith.mulf %53, %49 : vector<1x8x256xf32>
    %cst_37 = arith.constant 0.055555556 : f32
    %55 = vector.broadcast %cst_37 : f32 to vector<1x8x256xf32>
    %56 = arith.subf %49, %55 : vector<1x8x256xf32>
    %57 = arith.select %51, %54, %56 : vector<1x8x256xi1>, vector<1x8x256xf32>
    %58 = arith.mulf %57, %47 : vector<1x8x256xf32>
    %59 = vector.shape_cast %58 : vector<1x8x256xf32> to vector<1x1x8x256xf32>
    %cst_38 = arith.constant dense<0.000000e+00> : vector<1xf32>
    %60 = vector.multi_reduction <add>, %59, %cst_38 [1, 2, 3] : vector<1x1x8x256xf32> to vector<1xf32>
    %61 = vector.shape_cast %60 : vector<1xf32> to vector<1x1x1x1xf32>
    %62 = vector.extract %61[0, 0, 0, 0] : f32 from vector<1x1x1x1xf32>
    %cst_39 = arith.constant 0.000000e+00 : f32
    %63 = vector.broadcast %cst_39 : f32 to vector<1x8x256xf32>
    %64 = arith.cmpf ogt, %47, %63 : vector<1x8x256xf32>
    %65 = arith.extui %64 : vector<1x8x256xi1> to vector<1x8x256xi32>
    %66 = arith.sitofp %65 : vector<1x8x256xi32> to vector<1x8x256xf32>
    %67 = vector.shape_cast %66 : vector<1x8x256xf32> to vector<1x1x8x256xf32>
    %cst_40 = arith.constant dense<0.000000e+00> : vector<1xf32>
    %68 = vector.multi_reduction <add>, %67, %cst_40 [1, 2, 3] : vector<1x1x8x256xf32> to vector<1xf32>
    %69 = vector.shape_cast %68 : vector<1xf32> to vector<1x1x1x1xf32>
    %70 = vector.extract %69[0, 0, 0, 0] : f32 from vector<1x1x1x1xf32>
    %c0_41 = arith.constant 0 : index
    %71 = memref.load %arg13[%c0_41] : memref<8xf32, #tpu.memory_space<smem>>
    %72 = arith.addf %71, %18 : f32
    %c0_42 = arith.constant 0 : index
    %73 = memref.load %arg13[%c0_42] : memref<8xf32, #tpu.memory_space<smem>>
    memref.store %72, %arg13[%c0_42] : memref<8xf32, #tpu.memory_space<smem>>
    %c1 = arith.constant 1 : index
    %74 = memref.load %arg13[%c1] : memref<8xf32, #tpu.memory_space<smem>>
    %75 = arith.addf %74, %36 : f32
    %c1_43 = arith.constant 1 : index
    %76 = memref.load %arg13[%c1_43] : memref<8xf32, #tpu.memory_space<smem>>
    memref.store %75, %arg13[%c1_43] : memref<8xf32, #tpu.memory_space<smem>>
    %c2 = arith.constant 2 : index
    %77 = memref.load %arg13[%c2] : memref<8xf32, #tpu.memory_space<smem>>
    %78 = arith.addf %77, %44 : f32
    %c2_44 = arith.constant 2 : index
    %79 = memref.load %arg13[%c2_44] : memref<8xf32, #tpu.memory_space<smem>>
    memref.store %78, %arg13[%c2_44] : memref<8xf32, #tpu.memory_space<smem>>
    %c3 = arith.constant 3 : index
    %80 = memref.load %arg13[%c3] : memref<8xf32, #tpu.memory_space<smem>>
    %81 = arith.addf %80, %62 : f32
    %c3_45 = arith.constant 3 : index
    %82 = memref.load %arg13[%c3_45] : memref<8xf32, #tpu.memory_space<smem>>
    memref.store %81, %arg13[%c3_45] : memref<8xf32, #tpu.memory_space<smem>>
    %c4 = arith.constant 4 : index
    %83 = memref.load %arg13[%c4] : memref<8xf32, #tpu.memory_space<smem>>
    %84 = arith.addf %83, %70 : f32
    %c4_46 = arith.constant 4 : index
    %85 = memref.load %arg13[%c4_46] : memref<8xf32, #tpu.memory_space<smem>>
    memref.store %84, %arg13[%c4_46] : memref<8xf32, #tpu.memory_space<smem>>
    %86 = arith.extui %5 : i1 to i32
    %c0_i32_47 = arith.constant 0 : i32
    %87 = arith.cmpi ne, %86, %c0_i32_47 : i32
    scf.if %87 {
      %c0_48 = arith.constant 0 : index
      %88 = memref.load %arg13[%c0_48] : memref<8xf32, #tpu.memory_space<smem>>
      %cst_49 = arith.constant 4.8828125E-4 : f32
      %89 = arith.mulf %88, %cst_49 : f32
      %c0_50 = arith.constant 0 : index
      %c0_51 = arith.constant 0 : index
      %90 = memref.load %arg11[%c0_50, %c0_51] : memref<1x1xf32, #tpu.memory_space<smem>>
      memref.store %89, %arg11[%c0_50, %c0_51] : memref<1x1xf32, #tpu.memory_space<smem>>
      %c2_52 = arith.constant 2 : index
      %91 = memref.load %arg13[%c2_52] : memref<8xf32, #tpu.memory_space<smem>>
      %cst_53 = arith.constant 0.000000e+00 : f32
      %92 = arith.cmpf oeq, %91, %cst_53 : f32
      %c2_54 = arith.constant 2 : index
      %93 = memref.load %arg13[%c2_54] : memref<8xf32, #tpu.memory_space<smem>>
      %cst_55 = arith.constant 1.000000e+00 : f32
      %94 = arith.select %92, %cst_55, %93 : f32
      %c4_56 = arith.constant 4 : index
      %95 = memref.load %arg13[%c4_56] : memref<8xf32, #tpu.memory_space<smem>>
      %cst_57 = arith.constant 0.000000e+00 : f32
      %96 = arith.cmpf oeq, %95, %cst_57 : f32
      %c4_58 = arith.constant 4 : index
      %97 = memref.load %arg13[%c4_58] : memref<8xf32, #tpu.memory_space<smem>>
      %cst_59 = arith.constant 1.000000e+00 : f32
      %98 = arith.select %96, %cst_59, %97 : f32
      %c1_60 = arith.constant 1 : index
      %99 = memref.load %arg13[%c1_60] : memref<8xf32, #tpu.memory_space<smem>>
      %100 = arith.divf %99, %94 : f32
      %c3_61 = arith.constant 3 : index
      %101 = memref.load %arg13[%c3_61] : memref<8xf32, #tpu.memory_space<smem>>
      %102 = arith.divf %101, %98 : f32
      %103 = arith.addf %100, %102 : f32
      %cst_62 = arith.constant 3.000000e-02 : f32
      %104 = arith.mulf %103, %cst_62 : f32
      %c0_63 = arith.constant 0 : index
      %c0_64 = arith.constant 0 : index
      %105 = memref.load %arg12[%c0_63, %c0_64] : memref<1x1xf32, #tpu.memory_space<smem>>
      memref.store %104, %arg12[%c0_63, %c0_64] : memref<1x1xf32, #tpu.memory_space<smem>>
    } else {
    }
    return
  }
  func.func @transform_0(%arg0: i32, %arg1: i32) -> (i32, i32, i32) {
    %c0_i32 = arith.constant 0 : i32
    %c0_i32_0 = arith.constant 0 : i32
    return %arg0, %c0_i32, %arg1 : i32, i32, i32
  }
  func.func @transform_1(%arg0: i32, %arg1: i32) -> (i32, i32, i32) {
    %c0_i32 = arith.constant 0 : i32
    %c0_i32_0 = arith.constant 0 : i32
    return %arg0, %c0_i32, %arg1 : i32, i32, i32
  }
  func.func @transform_2(%arg0: i32, %arg1: i32) -> (i32, i32, i32) {
    %c0_i32 = arith.constant 0 : i32
    %c0_i32_0 = arith.constant 0 : i32
    return %arg0, %c0_i32, %arg1 : i32, i32, i32
  }
  func.func @transform_3(%arg0: i32, %arg1: i32) -> (i32, i32, i32) {
    %c0_i32 = arith.constant 0 : i32
    %c0_i32_0 = arith.constant 0 : i32
    return %arg0, %c0_i32, %arg1 : i32, i32, i32
  }
  func.func @transform_4(%arg0: i32, %arg1: i32) -> (i32, i32, i32) {
    %c0_i32 = arith.constant 0 : i32
    %c0_i32_0 = arith.constant 0 : i32
    return %arg0, %c0_i32, %arg1 : i32, i32, i32
  }
  func.func @transform_5(%arg0: i32, %arg1: i32) -> (i32, i32, i32) {
    %c0_i32 = arith.constant 0 : i32
    %c0_i32_0 = arith.constant 0 : i32
    return %arg0, %c0_i32, %arg1 : i32, i32, i32
  }
  func.func @transform_6(%arg0: i32, %arg1: i32) -> (i32, i32, i32) {
    %c0_i32 = arith.constant 0 : i32
    %c0_i32_0 = arith.constant 0 : i32
    return %arg0, %c0_i32, %arg1 : i32, i32, i32
  }
  func.func @transform_7(%arg0: i32, %arg1: i32) -> (i32, i32, i32) {
    %c0_i32 = arith.constant 0 : i32
    %c0_i32_0 = arith.constant 0 : i32
    return %arg0, %c0_i32, %arg1 : i32, i32, i32
  }
  func.func @transform_8(%arg0: i32, %arg1: i32) -> (i32, i32, i32) {
    %c0_i32 = arith.constant 0 : i32
    %c0_i32_0 = arith.constant 0 : i32
    return %arg0, %c0_i32, %arg1 : i32, i32, i32
  }
  func.func @transform_9(%arg0: i32, %arg1: i32) -> (i32, i32) {
    %c0_i32 = arith.constant 0 : i32
    %c0_i32_0 = arith.constant 0 : i32
    %c0_i32_1 = arith.constant 0 : i32
    return %c0_i32, %c0_i32_0 : i32, i32
  }
  func.func @transform_10(%arg0: i32, %arg1: i32) -> (i32, i32) {
    %c0_i32 = arith.constant 0 : i32
    %c0_i32_0 = arith.constant 0 : i32
    %c0_i32_1 = arith.constant 0 : i32
    return %c0_i32, %c0_i32_0 : i32, i32
  }
}

</mosaic_0001>

<llo_original>
// kernel: tpu_custom_call.1
$region0: #{tpu_custom_call.1}
  #allocation0 [shape = 'u32[]', space=smem, size = 0x4, offset = 0x4, fixed_abs, tag = 'smem constant byte address 0x4 - core index']
  #allocation1 [shape = 'u32[72,128]{1,0:T(1,128)}', space=vmem, size = 0x9000, scoped, tag = 'internal scratch']
  #allocation2 [shape = 'f32[8]{0:T(128)}', space=smem, size = 0x200, scoped, tag = 'scratch operand']
  %s0 = inlined_call_operand.hbm [shape: f32[2,4,256], index: 0, kind: input, shape index: {}]
  %s1 = inlined_call_operand.hbm [shape: f32[2,4,256], index: 1, kind: input, shape index: {}]
  %s2 = inlined_call_operand.hbm [shape: f32[2,1,256], index: 2, kind: input, shape index: {}]
  %s3 = inlined_call_operand.hbm [shape: f32[2,8,256], index: 3, kind: input, shape index: {}]
  %s4 = inlined_call_operand.hbm [shape: f32[2,8,256], index: 4, kind: input, shape index: {}]
  %s5 = inlined_call_operand.hbm [shape: f32[2,8,256], index: 5, kind: input, shape index: {}]
  %s6 = inlined_call_operand.hbm [shape: f32[2,8,256], index: 6, kind: input, shape index: {}]
  %s7 = inlined_call_operand.hbm [shape: f32[2,8,256], index: 7, kind: input, shape index: {}]
  %s8 = inlined_call_operand.hbm [shape: f32[2,8,256], index: 8, kind: input, shape index: {}]
  %s9 = inlined_call_operand.hbm [shape: f32[1,1], index: 9, kind: output, shape index: {0}]
  %s10 = inlined_call_operand.hbm [shape: f32[1,1], index: 10, kind: output, shape index: {1}]
  %11 = xla_tuple %s9, %s10
  %s12 = sld [smem:[#allocation0]]
  $region121: #{tpu_custom_call.1} parent=0
    _
  %s14 = ssub.s32 1, %s12
  %s15 = scalar_select 0, %s14, %s12
  $region1: #{tpu_custom_call.1} parent=0
    #allocation3 [shape = 'u8[8192]{0}', space=vmem, size = 0x2000, scoped, tag = 'input window, operand 0']
    #allocation4 [shape = 's32[2]{0}', space=sflag, size = 0x8, scoped, tag = 'scoped memory for tpu_custom_call.1']
    #allocation5 [shape = 's32[2]{0}', space=sflag, size = 0x8, scoped, tag = 'scoped memory for tpu_custom_call.1']
    #allocation6 [shape = 'u8[8192]{0}', space=vmem, size = 0x2000, scoped, tag = 'input window, operand 1']
    #allocation7 [shape = 's32[2]{0}', space=sflag, size = 0x8, scoped, tag = 'scoped memory for tpu_custom_call.1']
    #allocation8 [shape = 'u8[2048]{0}', space=vmem, size = 0x800, scoped, tag = 'input window, operand 2']
    #allocation9 [shape = 'u8[16384]{0}', space=vmem, size = 0x4000, scoped, tag = 'input window, operand 3']
    #allocation10 [shape = 's32[2]{0}', space=sflag, size = 0x8, scoped, tag = 'scoped memory for tpu_custom_call.1']
    #allocation11 [shape = 'u8[16384]{0}', space=vmem, size = 0x4000, scoped, tag = 'input window, operand 4']
    #allocation12 [shape = 'u8[16384]{0}', space=vmem, size = 0x4000, scoped, tag = 'input window, operand 5']
    #allocation13 [shape = 's32[2]{0}', space=sflag, size = 0x8, scoped, tag = 'scoped memory for tpu_custom_call.1']
    #allocation14 [shape = 'u8[16384]{0}', space=vmem, size = 0x4000, scoped, tag = 'input window, operand 6']
    #allocation15 [shape = 'u8[16384]{0}', space=vmem, size = 0x4000, scoped, tag = 'input window, operand 7']
    #allocation16 [shape = 's32[2]{0}', space=sflag, size = 0x8, scoped, tag = 'scoped memory for tpu_custom_call.1']
    #allocation17 [shape = 'u8[16384]{0}', space=vmem, size = 0x4000, scoped, tag = 'input window, operand 8']
    #allocation18 [shape = 'u8[512]{0}', space=smem, size = 0x200, scoped, tag = 'output window, operand 0, single buffered']
    #allocation19 [shape = 'u8[512]{0}', space=smem, size = 0x200, scoped, tag = 'output window, operand 1, single buffered']
    #allocation20 [shape = 's32[1]{0}', space=sflag, size = 0x4, scoped, tag = 'scoped memory for tpu_custom_call.1']
    %16 = vsyncpa [#allocation4], 0
    %s17 = scalar_lea.sflag [#allocation4], 1
    %18 = vsyncpa %s17, 0
    %19 = vsyncpa [#allocation7], 0
    %s20 = scalar_lea.sflag [#allocation7], 1
    %21 = vsyncpa %s20, 0
    %22 = vsyncpa [#allocation10], 0
    %s23 = scalar_lea.sflag [#allocation10], 1
    %24 = vsyncpa %s23, 0
    %25 = vsyncpa [#allocation13], 0
    %s26 = scalar_lea.sflag [#allocation13], 1
    %27 = vsyncpa %s26, 0
    %28 = vsyncpa [#allocation16], 0
    %s29 = scalar_lea.sflag [#allocation16], 1
    %30 = vsyncpa %s29, 0
    %31 = vsyncpa [#allocation5], 0
    %32 = vsyncpa [#allocation20], 0
    loop: start=0, step=1, limit=4
    $region2: #{tpu_custom_call.1} parent=1 // loop_pre_header
      _
    $region3: #{tpu_custom_call.1} parent=1 // loop_header
      %s34 = sphi 0, %s38
      %p35 = scmp.ge.s32.totalorder %s34, 4
      %s41 = sphi 0, %s53
      %s42 = sphi 0, %s49
      %s43 = sphi 0, %s41
      %s44 = sphi 0, %s42
      %s45 = sphi 0, %s43
      %s46 = sphi 0, %s44
      %s58 = sphi 0, %s60
      %s61 = sphi 0, %s58
      %s62 = sphi 0, %s61
      %s78 = sphi 0, %s62
      %s86 = sphi 0, %s88
      %s89 = sphi 0, %s86
      %s90 = sphi 0, %s89
      %s106 = sphi 0, %s90
      %s114 = sphi 0, %s116
      %s117 = sphi 0, %s114
      %s118 = sphi 0, %s117
      %s134 = sphi 0, %s118
      %s142 = sphi 0, %s144
      %s145 = sphi 0, %s142
      %s146 = sphi 0, %s145
      %s162 = sphi 0, %s146
      %s170 = sphi 0, %s172
      %s173 = sphi 0, %s170
      %s174 = sphi 0, %s173
      %s190 = sphi 0, %s174
      %s198 = sphi 0, %s200
      %s201 = sphi 0, %s198
      %s202 = sphi 0, %s201
      %s218 = sphi 0, %s202
      %s226 = sphi 0, %s228
      %s229 = sphi 0, %s226
      %s230 = sphi 0, %s229
      %s246 = sphi 0, %s230
      %s254 = sphi 0, %s256
      %s257 = sphi 0, %s254
      %s258 = sphi 0, %s257
      %s274 = sphi 0, %s258
      %s282 = sphi 0, %s284
      %s285 = sphi 0, %s282
      %s286 = sphi 0, %s285
      %s302 = sphi 0, %s286
      %s306 = sphi 0, %s306
      %s308 = sphi 0, %s306
      %s309 = sphi 0, %s308
      %s323 = sphi 0, %s309
      %s327 = sphi 0, %s327
      %s329 = sphi 0, %s327
      %s330 = sphi 0, %s329
      %s344 = sphi 0, %s330
    $region4: #{tpu_custom_call.1} parent=1 // loop_header_branch
      %37 = sbr.rel (%p35) target = $region8
    $region5: #{tpu_custom_call.1} parent=1 // loop_body
      %s39 = ssub.s32 %s34, 1
      %s40 = ssub.s32 %s34, 2
      %s47 = sadd.s32 1, %s42
      %p48 = scmp.ge.s32.totalorder %s47, 1
      %s49 = scalar_select %p48, 0, %s47
      %s50 = sadd.s32 1, %s41
      %s51 = scalar_select %p48, %s50, %s41
      %p52 = scmp.ge.s32.totalorder %s51, 2
      %s53 = scalar_select %p52, 0, %s51
      %s54 = ssub.s32 %s41, %s53
      %s55 = ssub.s32 %s42, %s49
      %s56 = sor.u32 %s54, %s55
      %p57 = scmp.eq.s32.totalorder %s56, 0
      %s59 = sadd.s32 %s58, 1
      %s60 = scalar_select %p57, %s58, %s59
      %p63 = pneg %p57
      %p64 = scmp.eq.s32.totalorder %s34, 1
      %p65 = por %p63, %p64
      %p66 = scmp.ne.s32.totalorder %s58, %s61
      %p67 = scmp.eq.s32.totalorder %s34, 0
      %p68 = por %p66, %p67
      %p69 = scmp.ne.s32.totalorder %s58, %s61
      %p70 = scmp.eq.s32.totalorder %s39, 1
      %p71 = por %p69, %p70
      %p72 = scmp.ne.s32.totalorder %s61, %s62
      %p73 = scmp.eq.s32.totalorder %s39, 0
      %p74 = por %p72, %p73
      %p75 = scmp.ne.s32.totalorder %s61, %s62
      %p76 = scmp.eq.s32.totalorder %s40, 1
      %p77 = por %p75, %p76
      %p79 = scmp.ne.s32.totalorder %s62, %s78
      %p80 = scmp.eq.s32.totalorder %s40, 0
      %p81 = por %p79, %p80
      %s82 = ssub.s32 %s41, %s53
      %s83 = ssub.s32 %s42, %s49
      %s84 = sor.u32 %s82, %s83
      %p85 = scmp.eq.s32.totalorder %s84, 0
      %s87 = sadd.s32 %s86, 1
      %s88 = scalar_select %p85, %s86, %s87
      %p91 = pneg %p85
      %p92 = scmp.eq.s32.totalorder %s34, 1
      %p93 = por %p91, %p92
      %p94 = scmp.ne.s32.totalorder %s86, %s89
      %p95 = scmp.eq.s32.totalorder %s34, 0
      %p96 = por %p94, %p95
      %p97 = scmp.ne.s32.totalorder %s86, %s89
      %p98 = scmp.eq.s32.totalorder %s39, 1
      %p99 = por %p97, %p98
      %p100 = scmp.ne.s32.totalorder %s89, %s90
      %p101 = scmp.eq.s32.totalorder %s39, 0
      %p102 = por %p100, %p101
      %p103 = scmp.ne.s32.totalorder %s89, %s90
      %p104 = scmp.eq.s32.totalorder %s40, 1
      %p105 = por %p103, %p104
      %p107 = scmp.ne.s32.totalorder %s90, %s106
      %p108 = scmp.eq.s32.totalorder %s40, 0
      %p109 = por %p107, %p108
      %s110 = ssub.s32 %s41, %s53
      %s111 = ssub.s32 %s42, %s49
      %s112 = sor.u32 %s110, %s111
      %p113 = scmp.eq.s32.totalorder %s112, 0
      %s115 = sadd.s32 %s114, 1
      %s116 = scalar_select %p113, %s114, %s115
      %p119 = pneg %p113
      %p120 = scmp.eq.s32.totalorder %s34, 1
      %p121 = por %p119, %p120
      %p122 = scmp.ne.s32.totalorder %s114, %s117
      %p123 = scmp.eq.s32.totalorder %s34, 0
      %p124 = por %p122, %p123
      %p125 = scmp.ne.s32.totalorder %s114, %s117
      %p126 = scmp.eq.s32.totalorder %s39, 1
      %p127 = por %p125, %p126
      %p128 = scmp.ne.s32.totalorder %s117, %s118
      %p129 = scmp.eq.s32.totalorder %s39, 0
      %p130 = por %p128, %p129
      %p131 = scmp.ne.s32.totalorder %s117, %s118
      %p132 = scmp.eq.s32.totalorder %s40, 1
      %p133 = por %p131, %p132
      %p135 = scmp.ne.s32.totalorder %s118, %s134
      %p136 = scmp.eq.s32.totalorder %s40, 0
      %p137 = por %p135, %p136
      %s138 = ssub.s32 %s41, %s53
      %s139 = ssub.s32 %s42, %s49
      %s140 = sor.u32 %s138, %s139
      %p141 = scmp.eq.s32.totalorder %s140, 0
      %s143 = sadd.s32 %s142, 1
      %s144 = scalar_select %p141, %s142, %s143
      %p147 = pneg %p141
      %p148 = scmp.eq.s32.totalorder %s34, 1
      %p149 = por %p147, %p148
      %p150 = scmp.ne.s32.totalorder %s142, %s145
      %p151 = scmp.eq.s32.totalorder %s34, 0
      %p152 = por %p150, %p151
      %p153 = scmp.ne.s32.totalorder %s142, %s145
      %p154 = scmp.eq.s32.totalorder %s39, 1
      %p155 = por %p153, %p154
      %p156 = scmp.ne.s32.totalorder %s145, %s146
      %p157 = scmp.eq.s32.totalorder %s39, 0
      %p158 = por %p156, %p157
      %p159 = scmp.ne.s32.totalorder %s145, %s146
      %p160 = scmp.eq.s32.totalorder %s40, 1
      %p161 = por %p159, %p160
      %p163 = scmp.ne.s32.totalorder %s146, %s162
      %p164 = scmp.eq.s32.totalorder %s40, 0
      %p165 = por %p163, %p164
      %s166 = ssub.s32 %s41, %s53
      %s167 = ssub.s32 %s42, %s49
      %s168 = sor.u32 %s166, %s167
      %p169 = scmp.eq.s32.totalorder %s168, 0
      %s171 = sadd.s32 %s170, 1
      %s172 = scalar_select %p169, %s170, %s171
      %p175 = pneg %p169
      %p176 = scmp.eq.s32.totalorder %s34, 1
      %p177 = por %p175, %p176
      %p178 = scmp.ne.s32.totalorder %s170, %s173
      %p179 = scmp.eq.s32.totalorder %s34, 0
      %p180 = por %p178, %p179
      %p181 = scmp.ne.s32.totalorder %s170, %s173
      %p182 = scmp.eq.s32.totalorder %s39, 1
      %p183 = por %p181, %p182
      %p184 = scmp.ne.s32.totalorder %s173, %s174
      %p185 = scmp.eq.s32.totalorder %s39, 0
      %p186 = por %p184, %p185
      %p187 = scmp.ne.s32.totalorder %s173, %s174
      %p188 = scmp.eq.s32.totalorder %s40, 1
      %p189 = por %p187, %p188
      %p191 = scmp.ne.s32.totalorder %s174, %s190
      %p192 = scmp.eq.s32.totalorder %s40, 0
      %p193 = por %p191, %p192
      %s194 = ssub.s32 %s41, %s53
      %s195 = ssub.s32 %s42, %s49
      %s196 = sor.u32 %s194, %s195
      %p197 = scmp.eq.s32.totalorder %s196, 0
      %s199 = sadd.s32 %s198, 1
      %s200 = scalar_select %p197, %s198, %s199
      %p203 = pneg %p197
      %p204 = scmp.eq.s32.totalorder %s34, 1
      %p205 = por %p203, %p204
      %p206 = scmp.ne.s32.totalorder %s198, %s201
      %p207 = scmp.eq.s32.totalorder %s34, 0
      %p208 = por %p206, %p207
      %p209 = scmp.ne.s32.totalorder %s198, %s201
      %p210 = scmp.eq.s32.totalorder %s39, 1
      %p211 = por %p209, %p210
      %p212 = scmp.ne.s32.totalorder %s201, %s202
      %p213 = scmp.eq.s32.totalorder %s39, 0
      %p214 = por %p212, %p213
      %p215 = scmp.ne.s32.totalorder %s201, %s202
      %p216 = scmp.eq.s32.totalorder %s40, 1
      %p217 = por %p215, %p216
      %p219 = scmp.ne.s32.totalorder %s202, %s218
      %p220 = scmp.eq.s32.totalorder %s40, 0
      %p221 = por %p219, %p220
      %s222 = ssub.s32 %s41, %s53
      %s223 = ssub.s32 %s42, %s49
      %s224 = sor.u32 %s222, %s223
      %p225 = scmp.eq.s32.totalorder %s224, 0
      %s227 = sadd.s32 %s226, 1
      %s228 = scalar_select %p225, %s226, %s227
      %p231 = pneg %p225
      %p232 = scmp.eq.s32.totalorder %s34, 1
      %p233 = por %p231, %p232
      %p234 = scmp.ne.s32.totalorder %s226, %s229
      %p235 = scmp.eq.s32.totalorder %s34, 0
      %p236 = por %p234, %p235
      %p237 = scmp.ne.s32.totalorder %s226, %s229
      %p238 = scmp.eq.s32.totalorder %s39, 1
      %p239 = por %p237, %p238
      %p240 = scmp.ne.s32.totalorder %s229, %s230
      %p241 = scmp.eq.s32.totalorder %s39, 0
      %p242 = por %p240, %p241
      %p243 = scmp.ne.s32.totalorder %s229, %s230
      %p244 = scmp.eq.s32.totalorder %s40, 1
      %p245 = por %p243, %p244
      %p247 = scmp.ne.s32.totalorder %s230, %s246
      %p248 = scmp.eq.s32.totalorder %s40, 0
      %p249 = por %p247, %p248
      %s250 = ssub.s32 %s41, %s53
      %s251 = ssub.s32 %s42, %s49
      %s252 = sor.u32 %s250, %s251
      %p253 = scmp.eq.s32.totalorder %s252, 0
      %s255 = sadd.s32 %s254, 1
      %s256 = scalar_select %p253, %s254, %s255
      %p259 = pneg %p253
      %p260 = scmp.eq.s32.totalorder %s34, 1
      %p261 = por %p259, %p260
      %p262 = scmp.ne.s32.totalorder %s254, %s257
      %p263 = scmp.eq.s32.totalorder %s34, 0
      %p264 = por %p262, %p263
      %p265 = scmp.ne.s32.totalorder %s254, %s257
      %p266 = scmp.eq.s32.totalorder %s39, 1
      %p267 = por %p265, %p266
      %p268 = scmp.ne.s32.totalorder %s257, %s258
      %p269 = scmp.eq.s32.totalorder %s39, 0
      %p270 = por %p268, %p269
      %p271 = scmp.ne.s32.totalorder %s257, %s258
      %p272 = scmp.eq.s32.totalorder %s40, 1
      %p273 = por %p271, %p272
      %p275 = scmp.ne.s32.totalorder %s258, %s274
      %p276 = scmp.eq.s32.totalorder %s40, 0
      %p277 = por %p275, %p276
      %s278 = ssub.s32 %s41, %s53
      %s279 = ssub.s32 %s42, %s49
      %s280 = sor.u32 %s278, %s279
      %p281 = scmp.eq.s32.totalorder %s280, 0
      %s283 = sadd.s32 %s282, 1
      %s284 = scalar_select %p281, %s282, %s283
      %p287 = pneg %p281
      %p288 = scmp.eq.s32.totalorder %s34, 1
      %p289 = por %p287, %p288
      %p290 = scmp.ne.s32.totalorder %s282, %s285
      %p291 = scmp.eq.s32.totalorder %s34, 0
      %p292 = por %p290, %p291
      %p293 = scmp.ne.s32.totalorder %s282, %s285
      %p294 = scmp.eq.s32.totalorder %s39, 1
      %p295 = por %p293, %p294
      %p296 = scmp.ne.s32.totalorder %s285, %s286
      %p297 = scmp.eq.s32.totalorder %s39, 0
      %p298 = por %p296, %p297
      %p299 = scmp.ne.s32.totalorder %s285, %s286
      %p300 = scmp.eq.s32.totalorder %s40, 1
      %p301 = por %p299, %p300
      %p303 = scmp.ne.s32.totalorder %s286, %s302
      %p304 = scmp.eq.s32.totalorder %s40, 0
      %p305 = por %p303, %p304
      %s307 = sadd.s32 %s306, 1
      %p310 = scmp.eq.s32.totalorder %s34, 1
      %p311 = scmp.ne.s32.totalorder %s306, %s308
      %p312 = scmp.eq.s32.totalorder %s34, 0
      %p313 = por %p311, %p312
      %p314 = scmp.ne.s32.totalorder %s306, %s308
      %p315 = scmp.eq.s32.totalorder %s39, 1
      %p316 = por %p314, %p315
      %p317 = scmp.ne.s32.totalorder %s308, %s309
      %p318 = scmp.eq.s32.totalorder %s39, 0
      %p319 = por %p317, %p318
      %p320 = scmp.ne.s32.totalorder %s308, %s309
      %p321 = scmp.eq.s32.totalorder %s40, 1
      %p322 = por %p320, %p321
      %p324 = scmp.ne.s32.totalorder %s309, %s323
      %p325 = scmp.eq.s32.totalorder %s40, 0
      %p326 = por %p324, %p325
      %s328 = sadd.s32 %s327, 1
      %p331 = scmp.eq.s32.totalorder %s34, 1
      %p332 = scmp.ne.s32.totalorder %s327, %s329
      %p333 = scmp.eq.s32.totalorder %s34, 0
      %p334 = por %p332, %p333
      %p335 = scmp.ne.s32.totalorder %s327, %s329
      %p336 = scmp.eq.s32.totalorder %s39, 1
      %p337 = por %p335, %p336
      %p338 = scmp.ne.s32.totalorder %s329, %s330
      %p339 = scmp.eq.s32.totalorder %s39, 0
      %p340 = por %p338, %p339
      %p341 = scmp.ne.s32.totalorder %s329, %s330
      %p342 = scmp.eq.s32.totalorder %s40, 1
      %p343 = por %p341, %p342
      %p345 = scmp.ne.s32.totalorder %s330, %s344
      %p346 = scmp.eq.s32.totalorder %s40, 0
      %p347 = por %p345, %p346
      %p348 = scmp.le.s32.totalorder 1, %s34
      %p349 = scmp.lt.s32.totalorder %s34, 3
      %p350 = pnand %p348, %p349
      %p351 = pneg %p350
      // Predicated region
      $region9: #{tpu_custom_call.1} parent=5 // pred_check
        _
      $region10: #{tpu_custom_call.1} parent=5 // pred_check_branch
        %353 = sbr.rel (%p350) target = $region12
      $region11: #{tpu_custom_call.1} parent=5 // pred_region
        %s354 = ssub.s32 %s34, 1
      $region12: #{tpu_custom_call.1} parent=5 // pred_fallthru
        _
      %p355 = scmp.lt.s32.totalorder %s34, 2
      // Predicated region
      $region13: #{tpu_custom_call.1} parent=5 // pred_check
        %p356 = pneg %p355
      $region14: #{tpu_custom_call.1} parent=5 // pred_check_branch
        %358 = sbr.rel (%p356) target = $region16
      $region15: #{tpu_custom_call.1} parent=5 // pred_region
        // Predicated region
        $region17: #{tpu_custom_call.1} parent=15 // pred_check
          %p359 = pneg %p68
        $region18: #{tpu_custom_call.1} parent=15 // pred_check_branch
          %361 = sbr.rel (%p359) target = $region20
        $region19: #{tpu_custom_call.1} parent=15 // pred_region
          %s362 = sand.u32 %s58, 1
          %s363 = scalar_lea.sflag [#allocation4], %s362
          %s364 = sand.u32 %s58, 1
          %s365 = smul.addr %s364, 8
          %s366 = scalar_lea.vmem [#allocation3], %s365
          %s367 = smul.u32 2, %s42
          %369 = vsyncadd %s363, 0
          %s370 = smul.addr %s41, 2
          %s371 = sadd.s32 %s367, %s370
          %s372 = smul.addr %s371, 4
          %s373 = scalar_lea.hbm %s0, %s372
          %s375 = sshll.u32 %s373, 4
          %s376 = int_to_ptr.hbm [resolvable:$true] %s375
          %s377 = sshll.u32 %s366, 4
          %s378 = int_to_ptr.vmem [resolvable:$true] %s377
          %380 = dma.hbm_to_vmem [thread:$0]  %s376, 128, %s378, %s363
        $region20: #{tpu_custom_call.1} parent=15 // pred_fallthru
          _
        // Predicated region
        $region21: #{tpu_custom_call.1} parent=15 // pred_check
          %p381 = pneg %p96
        $region22: #{tpu_custom_call.1} parent=15 // pred_check_branch
          %383 = sbr.rel (%p381) target = $region24
        $region23: #{tpu_custom_call.1} parent=15 // pred_region
          %s384 = sand.u32 %s34, 1
          %s385 = scalar_lea.sflag [#allocation7], %s384
          %s386 = sand.u32 %s86, 1
          %s387 = smul.addr %s386, 8
          %s388 = scalar_lea.vmem [#allocation6], %s387
          %s389 = smul.u32 2, %s42
          %391 = vsyncadd %s385, 0
          %s392 = smul.addr %s41, 2
          %s393 = sadd.s32 %s389, %s392
          %s394 = smul.addr %s393, 4
          %s395 = scalar_lea.hbm %s1, %s394
          %s397 = sshll.u32 %s395, 4
          %s398 = int_to_ptr.hbm [resolvable:$true] %s397
          %s399 = sshll.u32 %s388, 4
          %s400 = int_to_ptr.vmem [resolvable:$true] %s399
          %402 = dma.hbm_to_vmem [thread:$0]  %s398, 128, %s400, %s385
        $region24: #{tpu_custom_call.1} parent=15 // pred_fallthru
          _
        // Predicated region
        $region25: #{tpu_custom_call.1} parent=15 // pred_check
          %p403 = pneg %p124
        $region26: #{tpu_custom_call.1} parent=15 // pred_check_branch
          %405 = sbr.rel (%p403) target = $region28
        $region27: #{tpu_custom_call.1} parent=15 // pred_region
          %s406 = sand.u32 %s34, 1
          %s407 = scalar_lea.sflag [#allocation7], %s406
          %s408 = sand.u32 %s114, 1
          %s409 = smul.addr %s408, 2
          %s410 = scalar_lea.vmem [#allocation8], %s409
          %s411 = smul.u32 2, %s42
          %413 = vsyncadd %s407, 0
          %s414 = smul.addr %s41, 2
          %s415 = sadd.s32 %s411, %s414
          %s416 = scalar_lea.hbm %s2, %s415
          %s418 = sshll.u32 %s416, 4
          %s419 = int_to_ptr.hbm [resolvable:$true] %s418
          %s420 = sshll.u32 %s410, 4
          %s421 = int_to_ptr.vmem [resolvable:$true] %s420
          %423 = dma.hbm_to_vmem [thread:$0]  %s419, 32, %s421, %s407
        $region28: #{tpu_custom_call.1} parent=15 // pred_fallthru
          _
        // Predicated region
        $region29: #{tpu_custom_call.1} parent=15 // pred_check
          %p424 = pneg %p152
        $region30: #{tpu_custom_call.1} parent=15 // pred_check_branch
          %426 = sbr.rel (%p424) target = $region32
        $region31: #{tpu_custom_call.1} parent=15 // pred_region
          %s427 = sand.u32 %s34, 1
          %s428 = scalar_lea.sflag [#allocation10], %s427
          %s429 = sand.u32 %s142, 1
          %s430 = smul.addr %s429, 16
          %s431 = scalar_lea.vmem [#allocation9], %s430
          %s432 = smul.u32 2, %s42
          %434 = vsyncadd %s428, 0
          %s435 = smul.addr %s41, 2
          %s436 = sadd.s32 %s432, %s435
          %s437 = smul.addr %s436, 8
          %s438 = scalar_lea.hbm %s3, %s437
          %s440 = sshll.u32 %s438, 4
          %s441 = int_to_ptr.hbm [resolvable:$true] %s440
          %s442 = sshll.u32 %s431, 4
          %s443 = int_to_ptr.vmem [resolvable:$true] %s442
          %445 = dma.hbm_to_vmem [thread:$0]  %s441, 256, %s443, %s428
        $region32: #{tpu_custom_call.1} parent=15 // pred_fallthru
          _
        // Predicated region
        $region33: #{tpu_custom_call.1} parent=15 // pred_check
          %p446 = pneg %p180
        $region34: #{tpu_custom_call.1} parent=15 // pred_check_branch
          %448 = sbr.rel (%p446) target = $region36
        $region35: #{tpu_custom_call.1} parent=15 // pred_region
          %s449 = sand.u32 %s34, 1
          %s450 = scalar_lea.sflag [#allocation10], %s449
          %s451 = sand.u32 %s170, 1
          %s452 = smul.addr %s451, 16
          %s453 = scalar_lea.vmem [#allocation11], %s452
          %s454 = smul.u32 2, %s42
          %456 = vsyncadd %s450, 0
          %s457 = smul.addr %s41, 2
          %s458 = sadd.s32 %s454, %s457
          %s459 = smul.addr %s458, 8
          %s460 = scalar_lea.hbm %s4, %s459
          %s462 = sshll.u32 %s460, 4
          %s463 = int_to_ptr.hbm [resolvable:$true] %s462
          %s464 = sshll.u32 %s453, 4
          %s465 = int_to_ptr.vmem [resolvable:$true] %s464
          %467 = dma.hbm_to_vmem [thread:$0]  %s463, 256, %s465, %s450
        $region36: #{tpu_custom_call.1} parent=15 // pred_fallthru
          _
        // Predicated region
        $region37: #{tpu_custom_call.1} parent=15 // pred_check
          %p468 = pneg %p208
        $region38: #{tpu_custom_call.1} parent=15 // pred_check_branch
          %470 = sbr.rel (%p468) target = $region40
        $region39: #{tpu_custom_call.1} parent=15 // pred_region
          %s471 = sand.u32 %s34, 1
          %s472 = scalar_lea.sflag [#allocation13], %s471
          %s473 = sand.u32 %s198, 1
          %s474 = smul.addr %s473, 16
          %s475 = scalar_lea.vmem [#allocation12], %s474
          %s476 = smul.u32 2, %s42
          %478 = vsyncadd %s472, 0
          %s479 = smul.addr %s41, 2
          %s480 = sadd.s32 %s476, %s479
          %s481 = smul.addr %s480, 8
          %s482 = scalar_lea.hbm %s5, %s481
          %s484 = sshll.u32 %s482, 4
          %s485 = int_to_ptr.hbm [resolvable:$true] %s484
          %s486 = sshll.u32 %s475, 4
          %s487 = int_to_ptr.vmem [resolvable:$true] %s486
          %489 = dma.hbm_to_vmem [thread:$0]  %s485, 256, %s487, %s472
        $region40: #{tpu_custom_call.1} parent=15 // pred_fallthru
          _
        // Predicated region
        $region41: #{tpu_custom_call.1} parent=15 // pred_check
          %p490 = pneg %p236
        $region42: #{tpu_custom_call.1} parent=15 // pred_check_branch
          %492 = sbr.rel (%p490) target = $region44
        $region43: #{tpu_custom_call.1} parent=15 // pred_region
          %s493 = sand.u32 %s34, 1
          %s494 = scalar_lea.sflag [#allocation13], %s493
          %s495 = sand.u32 %s226, 1
          %s496 = smul.addr %s495, 16
          %s497 = scalar_lea.vmem [#allocation14], %s496
          %s498 = smul.u32 2, %s42
          %500 = vsyncadd %s494, 0
          %s501 = smul.addr %s41, 2
          %s502 = sadd.s32 %s498, %s501
          %s503 = smul.addr %s502, 8
          %s504 = scalar_lea.hbm %s6, %s503
          %s506 = sshll.u32 %s504, 4
          %s507 = int_to_ptr.hbm [resolvable:$true] %s506
          %s508 = sshll.u32 %s497, 4
          %s509 = int_to_ptr.vmem [resolvable:$true] %s508
          %511 = dma.hbm_to_vmem [thread:$0]  %s507, 256, %s509, %s494
        $region44: #{tpu_custom_call.1} parent=15 // pred_fallthru
          _
        // Predicated region
        $region45: #{tpu_custom_call.1} parent=15 // pred_check
          %p512 = pneg %p264
        $region46: #{tpu_custom_call.1} parent=15 // pred_check_branch
          %514 = sbr.rel (%p512) target = $region48
        $region47: #{tpu_custom_call.1} parent=15 // pred_region
          %s515 = sand.u32 %s34, 1
          %s516 = scalar_lea.sflag [#allocation16], %s515
          %s517 = sand.u32 %s254, 1
          %s518 = smul.addr %s517, 16
          %s519 = scalar_lea.vmem [#allocation15], %s518
          %s520 = smul.u32 2, %s42
          %522 = vsyncadd %s516, 0
          %s523 = smul.addr %s41, 2
          %s524 = sadd.s32 %s520, %s523
          %s525 = smul.addr %s524, 8
          %s526 = scalar_lea.hbm %s7, %s525
          %s528 = sshll.u32 %s526, 4
          %s529 = int_to_ptr.hbm [resolvable:$true] %s528
          %s530 = sshll.u32 %s519, 4
          %s531 = int_to_ptr.vmem [resolvable:$true] %s530
          %533 = dma.hbm_to_vmem [thread:$0]  %s529, 256, %s531, %s516
        $region48: #{tpu_custom_call.1} parent=15 // pred_fallthru
          _
        // Predicated region
        $region49: #{tpu_custom_call.1} parent=15 // pred_check
          %p534 = pneg %p292
        $region50: #{tpu_custom_call.1} parent=15 // pred_check_branch
          %536 = sbr.rel (%p534) target = $region52
        $region51: #{tpu_custom_call.1} parent=15 // pred_region
          %s537 = sand.u32 %s34, 1
          %s538 = scalar_lea.sflag [#allocation16], %s537
          %s539 = sand.u32 %s282, 1
          %s540 = smul.addr %s539, 16
          %s541 = scalar_lea.vmem [#allocation17], %s540
          %s542 = smul.u32 2, %s42
          %544 = vsyncadd %s538, 0
          %s545 = smul.addr %s41, 2
          %s546 = sadd.s32 %s542, %s545
          %s547 = smul.addr %s546, 8
          %s548 = scalar_lea.hbm %s8, %s547
          %s550 = sshll.u32 %s548, 4
          %s551 = int_to_ptr.hbm [resolvable:$true] %s550
          %s552 = sshll.u32 %s541, 4
          %s553 = int_to_ptr.vmem [resolvable:$true] %s552
          %555 = dma.hbm_to_vmem [thread:$0]  %s551, 256, %s553, %s538
        $region52: #{tpu_custom_call.1} parent=15 // pred_fallthru
          _
      $region16: #{tpu_custom_call.1} parent=5 // pred_fallthru
        _
      %p556 = scmp.le.s32.totalorder 1, %s34
      %p557 = scmp.lt.s32.totalorder %s34, 3
      %p558 = pnand %p556, %p557
      %p559 = pneg %p558
      // Predicated region
      $region53: #{tpu_custom_call.1} parent=5 // pred_check
        _
      $region54: #{tpu_custom_call.1} parent=5 // pred_check_branch
        %561 = sbr.rel (%p558) target = $region56
      $region55: #{tpu_custom_call.1} parent=5 // pred_region
        %s562 = ssub.s32 %s34, 1
        %s563 = sand.u32 %s61, 1
        %s564 = scalar_lea.sflag [#allocation4], %s563
        %s565 = sand.u32 %s61, 1
        %s566 = smul.addr %s565, 8
        %s567 = scalar_lea.vmem [#allocation3], %s566
        // Predicated region
        $region57: #{tpu_custom_call.1} parent=55 // pred_check
          %p568 = pneg %p74
        $region58: #{tpu_custom_call.1} parent=55 // pred_check_branch
          %570 = sbr.rel (%p568) target = $region60
        $region59: #{tpu_custom_call.1} parent=55 // pred_region
          %572 = dma.done %s564, 128
        $region60: #{tpu_custom_call.1} parent=55 // pred_fallthru
          _
        %s573 = sand.u32 %s39, 1
        %s574 = scalar_lea.sflag [#allocation7], %s573
        %s575 = sand.u32 %s89, 1
        %s576 = smul.addr %s575, 8
        %s577 = scalar_lea.vmem [#allocation6], %s576
        // Predicated region
        $region61: #{tpu_custom_call.1} parent=55 // pred_check
          %p578 = pneg %p102
        $region62: #{tpu_custom_call.1} parent=55 // pred_check_branch
          %580 = sbr.rel (%p578) target = $region64
        $region63: #{tpu_custom_call.1} parent=55 // pred_region
          %582 = dma.done %s574, 128
        $region64: #{tpu_custom_call.1} parent=55 // pred_fallthru
          _
        %s583 = sand.u32 %s39, 1
        %s584 = scalar_lea.sflag [#allocation7], %s583
        %s585 = sand.u32 %s117, 1
        %s586 = smul.addr %s585, 2
        %s587 = scalar_lea.vmem [#allocation8], %s586
        // Predicated region
        $region65: #{tpu_custom_call.1} parent=55 // pred_check
          %p588 = pneg %p130
        $region66: #{tpu_custom_call.1} parent=55 // pred_check_branch
          %590 = sbr.rel (%p588) target = $region68
        $region67: #{tpu_custom_call.1} parent=55 // pred_region
          %592 = dma.done %s584, 32
        $region68: #{tpu_custom_call.1} parent=55 // pred_fallthru
          _
        %s593 = sand.u32 %s39, 1
        %s594 = scalar_lea.sflag [#allocation10], %s593
        %s595 = sand.u32 %s145, 1
        %s596 = smul.addr %s595, 16
        %s597 = scalar_lea.vmem [#allocation9], %s596
        // Predicated region
        $region69: #{tpu_custom_call.1} parent=55 // pred_check
          %p598 = pneg %p158
        $region70: #{tpu_custom_call.1} parent=55 // pred_check_branch
          %600 = sbr.rel (%p598) target = $region72
        $region71: #{tpu_custom_call.1} parent=55 // pred_region
          %602 = dma.done %s594, 256
        $region72: #{tpu_custom_call.1} parent=55 // pred_fallthru
          _
        %s603 = sand.u32 %s39, 1
        %s604 = scalar_lea.sflag [#allocation10], %s603
        %s605 = sand.u32 %s173, 1
        %s606 = smul.addr %s605, 16
        %s607 = scalar_lea.vmem [#allocation11], %s606
        // Predicated region
        $region73: #{tpu_custom_call.1} parent=55 // pred_check
          %p608 = pneg %p186
        $region74: #{tpu_custom_call.1} parent=55 // pred_check_branch
          %610 = sbr.rel (%p608) target = $region76
        $region75: #{tpu_custom_call.1} parent=55 // pred_region
          %612 = dma.done %s604, 256
        $region76: #{tpu_custom_call.1} parent=55 // pred_fallthru
          _
        %s613 = sand.u32 %s39, 1
        %s614 = scalar_lea.sflag [#allocation13], %s613
        %s615 = sand.u32 %s201, 1
        %s616 = smul.addr %s615, 16
        %s617 = scalar_lea.vmem [#allocation12], %s616
        // Predicated region
        $region77: #{tpu_custom_call.1} parent=55 // pred_check
          %p618 = pneg %p214
        $region78: #{tpu_custom_call.1} parent=55 // pred_check_branch
          %620 = sbr.rel (%p618) target = $region80
        $region79: #{tpu_custom_call.1} parent=55 // pred_region
          %622 = dma.done %s614, 256
        $region80: #{tpu_custom_call.1} parent=55 // pred_fallthru
          _
        %s623 = sand.u32 %s39, 1
        %s624 = scalar_lea.sflag [#allocation13], %s623
        %s625 = sand.u32 %s229, 1
        %s626 = smul.addr %s625, 16
        %s627 = scalar_lea.vmem [#allocation14], %s626
        // Predicated region
        $region81: #{tpu_custom_call.1} parent=55 // pred_check
          %p628 = pneg %p242
        $region82: #{tpu_custom_call.1} parent=55 // pred_check_branch
          %630 = sbr.rel (%p628) target = $region84
        $region83: #{tpu_custom_call.1} parent=55 // pred_region
          %632 = dma.done %s624, 256
        $region84: #{tpu_custom_call.1} parent=55 // pred_fallthru
          _
        %s633 = sand.u32 %s39, 1
        %s634 = scalar_lea.sflag [#allocation16], %s633
        %s635 = sand.u32 %s257, 1
        %s636 = smul.addr %s635, 16
        %s637 = scalar_lea.vmem [#allocation15], %s636
        // Predicated region
        $region85: #{tpu_custom_call.1} parent=55 // pred_check
          %p638 = pneg %p270
        $region86: #{tpu_custom_call.1} parent=55 // pred_check_branch
          %640 = sbr.rel (%p638) target = $region88
        $region87: #{tpu_custom_call.1} parent=55 // pred_region
          %642 = dma.done %s634, 256
        $region88: #{tpu_custom_call.1} parent=55 // pred_fallthru
          _
        %s643 = sand.u32 %s39, 1
        %s644 = scalar_lea.sflag [#allocation16], %s643
        %s645 = sand.u32 %s285, 1
        %s646 = smul.addr %s645, 16
        %s647 = scalar_lea.vmem [#allocation17], %s646
        // Predicated region
        $region89: #{tpu_custom_call.1} parent=55 // pred_check
          %p648 = pneg %p298
        $region90: #{tpu_custom_call.1} parent=55 // pred_check_branch
          %650 = sbr.rel (%p648) target = $region92
        $region91: #{tpu_custom_call.1} parent=55 // pred_region
          %652 = dma.done %s644, 256
        $region92: #{tpu_custom_call.1} parent=55 // pred_fallthru
          _
        %s653 = sand.u32 %s61, 1
        %s654 = scalar_lea.sflag [#allocation4], %s653
        %s655 = sand.u32 %s61, 1
        %s656 = smul.addr %s655, 8
        %s657 = scalar_lea.vmem [#allocation3], %s656
        %p658 = pneg %p74
        %p659 = pneg %p71
        %s660 = sand.u32 %s39, 1
        %s661 = scalar_lea.sflag [#allocation7], %s660
        %s662 = sand.u32 %s89, 1
        %s663 = smul.addr %s662, 8
        %s664 = scalar_lea.vmem [#allocation6], %s663
        %p665 = pneg %p102
        %p666 = pneg %p99
        %s667 = sand.u32 %s39, 1
        %s668 = scalar_lea.sflag [#allocation7], %s667
        %s669 = sand.u32 %s117, 1
        %s670 = smul.addr %s669, 2
        %s671 = scalar_lea.vmem [#allocation8], %s670
        %p672 = pneg %p130
        %p673 = pneg %p127
        %s674 = sand.u32 %s39, 1
        %s675 = scalar_lea.sflag [#allocation10], %s674
        %s676 = sand.u32 %s145, 1
        %s677 = smul.addr %s676, 16
        %s678 = scalar_lea.vmem [#allocation9], %s677
        %p679 = pneg %p158
        %p680 = pneg %p155
        %s681 = sand.u32 %s39, 1
        %s682 = scalar_lea.sflag [#allocation10], %s681
        %s683 = sand.u32 %s173, 1
        %s684 = smul.addr %s683, 16
        %s685 = scalar_lea.vmem [#allocation11], %s684
        %p686 = pneg %p186
        %p687 = pneg %p183
        %s688 = sand.u32 %s39, 1
        %s689 = scalar_lea.sflag [#allocation13], %s688
        %s690 = sand.u32 %s201, 1
        %s691 = smul.addr %s690, 16
        %s692 = scalar_lea.vmem [#allocation12], %s691
        %p693 = pneg %p214
        %p694 = pneg %p211
        %s695 = sand.u32 %s39, 1
        %s696 = scalar_lea.sflag [#allocation13], %s695
        %s697 = sand.u32 %s229, 1
        %s698 = smul.addr %s697, 16
        %s699 = scalar_lea.vmem [#allocation14], %s698
        %p700 = pneg %p242
        %p701 = pneg %p239
        %s702 = sand.u32 %s39, 1
        %s703 = scalar_lea.sflag [#allocation16], %s702
        %s704 = sand.u32 %s257, 1
        %s705 = smul.addr %s704, 16
        %s706 = scalar_lea.vmem [#allocation15], %s705
        %p707 = pneg %p270
        %p708 = pneg %p267
        %s709 = sand.u32 %s39, 1
        %s710 = scalar_lea.sflag [#allocation16], %s709
        %s711 = sand.u32 %s285, 1
        %s712 = smul.addr %s711, 16
        %s713 = scalar_lea.vmem [#allocation17], %s712
        %p714 = pneg %p298
        %p715 = pneg %p295
        %p716 = pneg %p319
        %p717 = pneg %p316
        %p718 = pneg %p340
        %p719 = pneg %p337
        %s720 = smul.u32 2, %s44
        %s721 = smul.u32 2, %s44
        %s722 = smul.u32 2, %s44
        %s723 = smul.u32 2, %s44
        %s724 = smul.u32 2, %s44
        %s725 = smul.u32 2, %s44
        %s726 = smul.u32 2, %s44
        %s727 = smul.u32 2, %s44
        %s728 = smul.u32 2, %s44
        %p729 = scmp.eq.s32.totalorder %s43, 0
        %p730 = scmp.eq.s32.totalorder %s44, 0
        %p731 = pnand %p729, %p730
        %p732 = pneg %p731
        %p733 = scmp.eq.s32.totalorder %s43, 1
        %p734 = pnand %p733, %p730
        %p735 = pneg %p734
        // Predicated region
        $region93: #{tpu_custom_call.1} parent=55 // pred_check
          _
        $region94: #{tpu_custom_call.1} parent=55 // pred_check_branch
          %737 = sbr.rel (%p731) target = $region96
        $region95: #{tpu_custom_call.1} parent=55 // pred_region
          %s738 = scalar_lea.smem [#allocation2], 0
          %739 = sst [smem:[%s738]] 0.0
          %s740 = scalar_lea.smem [#allocation2], 1
          %741 = sst [smem:[%s740]] 0.0
          %s742 = scalar_lea.smem [#allocation2], 2
          %743 = sst [smem:[%s742]] 0.0
          %s744 = scalar_lea.smem [#allocation2], 3
          %745 = sst [smem:[%s744]] 0.0
          %s746 = scalar_lea.smem [#allocation2], 4
          %747 = sst [smem:[%s746]] 0.0
        $region96: #{tpu_custom_call.1} parent=55 // pred_fallthru
          _
        %v748 = vld [vmem:[%s567] sm:$0xff]
        %v749 = vld [vmem:[%s577] sm:$0xff]
        %v750 = vld [vmem:[%s587] sm:$0x3]
        %v751 = vsub.f32 %v748, %v749
        %v752 = vmul.f32 %v751, %v751
        %v754 = vperm.slane %v750, 0
        %v755 = vperm.slane %v750, 1
        %v756 = vrot.slane %v755, 4
        %vm757 = vcmask 1043456
        %v758 = vsel %vm757, %v754, %v756
        %v760 = vmul.f32 %v752, %v758
        %762 = vst [vmem:[#allocation1] ss:$2 sm:$0xff] %v760
        %v763 = vld.sshfl [vmem:[#allocation1] sm:$0xff pattern:$0x75316420]
        %v764 = vld.sshfl [vmem:[#allocation1 + $0x8] sm:$0xff pattern:$0x75316420]
        %v767 = vsel %vm757, %v763, 0.0
        %v768 = vsel %vm757, %v764, 0.0
        %v769 = vadd.f32 %v767, %v768
        %770 = vadd.xlane.f32.xlu0 %v769
        %v771 = vpop.xlane.xlu0 %770
        %v772 = vrot.slane %v771, 4
        %v773 = vadd.f32 %v771, %v772
        %v774 = vrot.slane %v773, 2
        %v775 = vadd.f32 %v773, %v774
        %v776 = vrot.slane %v775, 1
        %v777 = vadd.f32 %v775, %v776
        %s778 = vtos %v777
        %v779 = vld [vmem:[%s597] sm:$0xff]
        %v780 = vld [vmem:[%s597 + $0x8] sm:$0xff]
        %v781 = vld [vmem:[%s607] sm:$0xff]
        %v782 = vld [vmem:[%s607 + $0x8] sm:$0xff]
        %v783 = vld [vmem:[%s617] sm:$0xff]
        %v784 = vld [vmem:[%s617 + $0x8] sm:$0xff]
        %v785 = vsub.f32 %v779, %v781
        %v786 = vsub.f32 %v780, %v782
        %v787 = vand.u32 2147483647, %v785
        %v788 = vand.u32 2147483647, %v786
        %vm789 = vcmp.lt.f32.partialorder %v787, 0.11111111
        %vm790 = vcmp.lt.f32.partialorder %v788, 0.11111111
        %v791 = vmul.f32 %v787, 4.5
        %v792 = vmul.f32 %v788, 4.5
        %v793 = vmul.f32 %v791, %v787
        %v794 = vmul.f32 %v792, %v788
        %v795 = vsub.f32 %v787, 0.055555556
        %v796 = vsub.f32 %v788, 0.055555556
        %v797 = vsel %vm789, %v793, %v795
        %v798 = vsel %vm790, %v794, %v796
        %v799 = vmul.f32 %v797, %v783
        %v800 = vmul.f32 %v798, %v784
        %v801 = vadd.f32 %v799, %v800
        %802 = vadd.xlane.f32.xlu0 %v801
        %v803 = vpop.xlane.xlu0 %802
        %v804 = vrot.slane %v803, 4
        %v805 = vadd.f32 %v803, %v804
        %v806 = vrot.slane %v805, 2
        %v807 = vadd.f32 %v805, %v806
        %v808 = vrot.slane %v807, 1
        %v809 = vadd.f32 %v807, %v808
        %s810 = vtos %v809
        %vm811 = vcmp.gt.f32.partialorder %v783, 0.0
        %vm812 = vcmp.gt.f32.partialorder %v784, 0.0
        %v813 = vsel %vm811, 1, 0
        %v814 = vsel %vm812, 1, 0
        %v815 = vcvt.s32.f32 %v813
        %v816 = vcvt.s32.f32 %v814
        %v817 = vadd.f32 %v815, %v816
        %818 = vadd.xlane.f32.xlu0 %v817
        %v819 = vpop.xlane.xlu0 %818
        %v820 = vrot.slane %v819, 4
        %v821 = vadd.f32 %v819, %v820
        %v822 = vrot.slane %v821, 2
        %v823 = vadd.f32 %v821, %v822
        %v824 = vrot.slane %v823, 1
        %v825 = vadd.f32 %v823, %v824
        %s826 = vtos %v825
        %v827 = vld [vmem:[%s627] sm:$0xff]
        %v828 = vld [vmem:[%s627 + $0x8] sm:$0xff]
        %v829 = vld [vmem:[%s637] sm:$0xff]
        %v830 = vld [vmem:[%s637 + $0x8] sm:$0xff]
        %v831 = vld [vmem:[%s647] sm:$0xff]
        %v832 = vld [vmem:[%s647 + $0x8] sm:$0xff]
        %v833 = vsub.f32 %v827, %v829
        %v834 = vsub.f32 %v828, %v830
        %v835 = vand.u32 2147483647, %v833
        %v836 = vand.u32 2147483647, %v834
        %vm837 = vcmp.lt.f32.partialorder %v835, 0.11111111
        %vm838 = vcmp.lt.f32.partialorder %v836, 0.11111111
        %v839 = vmul.f32 %v835, 4.5
        %v840 = vmul.f32 %v836, 4.5
        %v841 = vmul.f32 %v839, %v835
        %v842 = vmul.f32 %v840, %v836
        %v843 = vsub.f32 %v835, 0.055555556
        %v844 = vsub.f32 %v836, 0.055555556
        %v845 = vsel %vm837, %v841, %v843
        %v846 = vsel %vm838, %v842, %v844
        %v847 = vmul.f32 %v845, %v831
        %v848 = vmul.f32 %v846, %v832
        %v849 = vadd.f32 %v847, %v848
        %850 = vadd.xlane.f32.xlu0 %v849
        %v851 = vpop.xlane.xlu0 %850
        %v852 = vrot.slane %v851, 4
        %v853 = vadd.f32 %v851, %v852
        %v854 = vrot.slane %v853, 2
        %v855 = vadd.f32 %v853, %v854
        %v856 = vrot.slane %v855, 1
        %v857 = vadd.f32 %v855, %v856
        %s858 = vtos %v857
        %vm859 = vcmp.gt.f32.partialorder %v831, 0.0
        %vm860 = vcmp.gt.f32.partialorder %v832, 0.0
        %v861 = vsel %vm859, 1, 0
        %v862 = vsel %vm860, 1, 0
        %v863 = vcvt.s32.f32 %v861
        %v864 = vcvt.s32.f32 %v862
        %v865 = vadd.f32 %v863, %v864
        %866 = vadd.xlane.f32.xlu0 %v865
        %v867 = vpop.xlane.xlu0 %866
        %v868 = vrot.slane %v867, 4
        %v869 = vadd.f32 %v867, %v868
        %v870 = vrot.slane %v869, 2
        %v871 = vadd.f32 %v869, %v870
        %v872 = vrot.slane %v871, 1
        %v873 = vadd.f32 %v871, %v872
        %s874 = vtos %v873
        %s875 = sld [smem:[#allocation2]]
        %s876 = sadd.f32 %s875, %s778
        %s877 = scalar_lea.smem [#allocation2], 0
        %878 = sst [smem:[%s877]] %s876
        %s879 = sld [smem:[#allocation2 + $0x1]]
        %s880 = sadd.f32 %s879, %s810
        %s881 = scalar_lea.smem [#allocation2], 1
        %882 = sst [smem:[%s881]] %s880
        %s883 = sld [smem:[#allocation2 + $0x2]]
        %s884 = sadd.f32 %s883, %s826
        %s885 = scalar_lea.smem [#allocation2], 2
        %886 = sst [smem:[%s885]] %s884
        %s887 = sld [smem:[#allocation2 + $0x3]]
        %s888 = sadd.f32 %s887, %s858
        %s889 = scalar_lea.smem [#allocation2], 3
        %890 = sst [smem:[%s889]] %s888
        %s891 = sld [smem:[#allocation2 + $0x4]]
        %s892 = sadd.f32 %s891, %s874
        %s893 = scalar_lea.smem [#allocation2], 4
        %894 = sst [smem:[%s893]] %s892
        // Predicated region
        $region97: #{tpu_custom_call.1} parent=55 // pred_check
          _
        $region98: #{tpu_custom_call.1} parent=55 // pred_check_branch
          %896 = sbr.rel (%p734) target = $region100
        $region99: #{tpu_custom_call.1} parent=55 // pred_region
          %s897 = sld [smem:[#allocation2]]
          %s898 = smul.f32 %s897, 0.00048828125
          %s899 = scalar_lea.smem [#allocation18], 0
          %900 = sst [smem:[%s899]] %s898
          %s901 = sld [smem:[#allocation2 + $0x2]]
          %p902 = scmp.eq.f32.partialorder %s901, 0.0
          %s903 = scalar_select %p902, 1.0, %s901
          %s904 = sld [smem:[#allocation2 + $0x4]]
          %p905 = scmp.eq.f32.partialorder %s904, 0.0
          %s906 = scalar_select %p905, 1.0, %s904
          %s907 = sld [smem:[#allocation2 + $0x1]]
          %v908 = vstv %s903
          %v909 = vrcp.pop %v908
          %v910 = vmul.f32 %v908, %v909
          %v911 = vsub.f32 1.0, %v910
          %v912 = vmul.f32 %v909, %v911
          %v913 = vadd.f32 %v909, %v912
          %vm914 = vweird.f32 %v908
          %vm915 = vweird.f32 %v909
          %vm916 = vmor %vm914, %vm915
          %v917 = vsel %vm916, %v909, %v913
          %v918 = vand.u32 2147483647, %v908
          %vm919 = vcmp.eq.f32.partialorder %v918, 8.507059e+37
          %v920 = vand.u32 %v908, 2147483648
          %v921 = vor.u32 1.1754944e-38, %v920
          %v922 = vsel %vm919, %v921, %v917
          %s923 = vtos %v922
          %s924 = smul.f32 %s907, %s923
          %s925 = sld [smem:[#allocation2 + $0x3]]
          %v926 = vstv %s906
          %v927 = vrcp.pop %v926
          %v928 = vmul.f32 %v926, %v927
          %v929 = vsub.f32 1.0, %v928
          %v930 = vmul.f32 %v927, %v929
          %v931 = vadd.f32 %v927, %v930
          %vm932 = vweird.f32 %v926
          %vm933 = vweird.f32 %v927
          %vm934 = vmor %vm932, %vm933
          %v935 = vsel %vm934, %v927, %v931
          %v936 = vand.u32 2147483647, %v926
          %vm937 = vcmp.eq.f32.partialorder %v936, 8.507059e+37
          %v938 = vand.u32 %v926, 2147483648
          %v939 = vor.u32 1.1754944e-38, %v938
          %v940 = vsel %vm937, %v939, %v935
          %s941 = vtos %v940
          %s942 = smul.f32 %s925, %s941
          %s943 = sadd.f32 %s924, %s942
          %s944 = smul.f32 %s943, 0.03
          %s945 = scalar_lea.smem [#allocation19], 0
          %946 = sst [smem:[%s945]] %s944
        $region100: #{tpu_custom_call.1} parent=55 // pred_fallthru
          _
        // Predicated region
        $region101: #{tpu_custom_call.1} parent=55 // pred_check
          %p947 = pneg %p316
        $region102: #{tpu_custom_call.1} parent=55 // pred_check_branch
          %949 = sbr.rel (%p947) target = $region104
        $region103: #{tpu_custom_call.1} parent=55 // pred_region
          %951 = vsyncadd [#allocation5], 0
          %s953 = sshll.u32 %s9, 4
          %s954 = int_to_ptr.hbm [resolvable:$true] %s953
          %956 = dma.smem_to_hbm [#allocation18], 16, %s954, [#allocation5]
        $region104: #{tpu_custom_call.1} parent=55 // pred_fallthru
          _
        // Predicated region
        $region105: #{tpu_custom_call.1} parent=55 // pred_check
          %p957 = pneg %p337
        $region106: #{tpu_custom_call.1} parent=55 // pred_check_branch
          %959 = sbr.rel (%p957) target = $region108
        $region107: #{tpu_custom_call.1} parent=55 // pred_region
          %961 = vsyncadd [#allocation20], 0
          %s963 = sshll.u32 %s10, 4
          %s964 = int_to_ptr.hbm [resolvable:$true] %s963
          %966 = dma.smem_to_hbm [#allocation19], 16, %s964, [#allocation20]
        $region108: #{tpu_custom_call.1} parent=55 // pred_fallthru
          _
        // Predicated region
        $region109: #{tpu_custom_call.1} parent=55 // pred_check
          %p967 = pneg %p316
        $region110: #{tpu_custom_call.1} parent=55 // pred_check_branch
          %969 = sbr.rel (%p967) target = $region112
        $region111: #{tpu_custom_call.1} parent=55 // pred_region
          %971 = dma.done [#allocation5], 16
        $region112: #{tpu_custom_call.1} parent=55 // pred_fallthru
          _
        // Predicated region
        $region113: #{tpu_custom_call.1} parent=55 // pred_check
          %p972 = pneg %p337
        $region114: #{tpu_custom_call.1} parent=55 // pred_check_branch
          %974 = sbr.rel (%p972) target = $region116
        $region115: #{tpu_custom_call.1} parent=55 // pred_region
          %976 = dma.done [#allocation20], 16
        $region116: #{tpu_custom_call.1} parent=55 // pred_fallthru
          _
        %977 = sfence
      $region56: #{tpu_custom_call.1} parent=5 // pred_fallthru
        _
      %p978 = scmp.le.s32.totalorder 2, %s34
      // Predicated region
      $region117: #{tpu_custom_call.1} parent=5 // pred_check
        %p979 = pneg %p978
      $region118: #{tpu_custom_call.1} parent=5 // pred_check_branch
        %981 = sbr.rel (%p979) target = $region120
      $region119: #{tpu_custom_call.1} parent=5 // pred_region
        %s982 = ssub.s32 %s34, 2
      $region120: #{tpu_custom_call.1} parent=5 // pred_fallthru
        _
    $region6: #{tpu_custom_call.1} parent=1 // loop_footer
      %s38 = sadd.s32 1, %s34
    $region7: #{tpu_custom_call.1} parent=1 // loop_footer_branch
      %33 = sbr.rel target = $region3
    $region8: #{tpu_custom_call.1} parent=1 // loop_exit
      _
    %983 = vsyncpa [#allocation4], 1
    %s984 = scalar_lea.sflag [#allocation4], 1
    %985 = vsyncpa %s984, 1
    %986 = vsyncpa [#allocation7], 1
    %s987 = scalar_lea.sflag [#allocation7], 1
    %988 = vsyncpa %s987, 1
    %989 = vsyncpa [#allocation10], 1
    %s990 = scalar_lea.sflag [#allocation10], 1
    %991 = vsyncpa %s990, 1
    %992 = vsyncpa [#allocation13], 1
    %s993 = scalar_lea.sflag [#allocation13], 1
    %994 = vsyncpa %s993, 1
    %995 = vsyncpa [#allocation16], 1
    %s996 = scalar_lea.sflag [#allocation16], 1
    %997 = vsyncpa %s996, 1
    %998 = vsyncpa [#allocation5], 1
    %s999 = scalar_lea.sflag [#allocation5], 1
    %1000 = vsyncpa %s999, 1
    %1001 = vsyncpa [#allocation20], 1

</llo_original>
